<compile_context>
chip_gen: v7x
topology: tpu7x:2x2x1
jax: 0.10.0
libtpu: 0.0.40
codegen_flags: <defaults>
</compile_context>

<pallas_src>
import jax
import jax.numpy as jnp
from jax.experimental import pallas as pl
from jax.experimental.pallas import tpu as pltpu

NUM_PARTS = 4
_LANE = 128
_SUBLANE = 8


def _round_up(n, m):
    return (n + m - 1) // m * m


def caswin_head_kernel(part_ref, w1_ref, b1_ref, w2_ref, b2_ref, out_ref):
    """One grid step == one part classifier (ClassBlock, eval mode).

    part_ref: (1, Bp, C)   bf16  pooled part features for this part
    w1_ref:   (1, C, L)    bf16  Linear1 weight with BN folded in
    b1_ref:   (1, 1, L)    f32   Linear1 bias with BN folded in
    w2_ref:   (1, L, NCp)  bf16  classifier weight (padded to lane multiple)
    b2_ref:   (1, 1, NCp)  f32   classifier bias (padded)
    out_ref:  (1, Bp, NCp) f32
    """
    part = part_ref[0]                                   # (Bp, C) bf16
    # Linear1 (+ folded BN): native bf16 MXU matmul, f32 accumulation.
    h = jnp.dot(part, w1_ref[0], preferred_element_type=jnp.float32) + b1_ref[0]
    # Classifier: cast the small (Bp, L) activation down to bf16 instead of
    # upcasting the large (L, NCp) weight tile.
    y = jnp.dot(h.astype(jnp.bfloat16), w2_ref[0],
                preferred_element_type=jnp.float32) + b2_ref[0]
    out_ref[0] = y.astype(out_ref.dtype)


def _pool_parts(x):
    """torch.mean(x, dim=1) + the 4 weighted part sums -> (NUM_PARTS, B, C)."""
    xp = jnp.mean(x.astype(jnp.float32), axis=1)         # (B, W, C)
    return jnp.stack([
        xp[:, 3, :],
        xp[:, 2, :] + xp[:, 4, :] * 0.5,
        xp[:, 1, :] + xp[:, 5, :] * 0.5,
        xp[:, 0, :] + xp[:, 6, :] * 0.25,
    ], axis=0)                                            # (4, B, C)


def caswin_head_pallas(x, prepared, class_num):
    """x: (B, H=7, W=7, C) NHWC backbone features. Returns list of 4 (B, class_num)."""
    w1, b1, w2, b2 = prepared
    B, H, W, C = x.shape
    L = w1.shape[-1]
    NCp = w2.shape[-1]

    parts = _pool_parts(x)                                # (4, B, C) f32, once
    Bp = _round_up(max(B, _SUBLANE), _SUBLANE)            # sublane-align batch
    if Bp != B:
        parts = jnp.pad(parts, ((0, 0), (0, Bp - B), (0, 0)))
    parts = parts.astype(jnp.bfloat16)

    out = pl.pallas_call(
        caswin_head_kernel,
        out_shape=jax.ShapeDtypeStruct((NUM_PARTS, Bp, NCp), jnp.float32),
        grid_spec=pl.GridSpec(
            grid=(NUM_PARTS,),
            in_specs=[
                pl.BlockSpec((1, Bp, C),  lambda i: (i, 0, 0)),
                pl.BlockSpec((1, C, L),   lambda i: (i, 0, 0)),
                pl.BlockSpec((1, 1, L),   lambda i: (i, 0, 0)),
                pl.BlockSpec((1, L, NCp), lambda i: (i, 0, 0)),
                pl.BlockSpec((1, 1, NCp), lambda i: (i, 0, 0)),
            ],
            out_specs=pl.BlockSpec((1, Bp, NCp), lambda i: (i, 0, 0)),
        ),
        compiler_params=pltpu.CompilerParams(
            dimension_semantics=("parallel",)),
    )(parts, w1, b1, w2, b2)

    # y_local: list of 4 (B, class_num) logits, matching the PyTorch module.
    return [out[i, :B, :class_num] for i in range(NUM_PARTS)]


def init_raw_params(key, input_dim, linear_num, class_num):
    """Mirrors the PyTorch init (weights_init_kaiming / weights_init_classifier).

    Linear(input_dim, linear): kaiming_normal(fan_out) -> std sqrt(2/linear), bias 0
    BatchNorm1d(linear): gamma ~ N(1, 0.02), beta 0, running stats (mean 0, var 1)
    classifier Linear(linear, class_num): weight ~ N(0, 0.001), bias 0
    """
    keys = jax.random.split(key, 3 * NUM_PARTS)
    std1 = (2.0 / linear_num) ** 0.5
    w1_l, g_l, w2_l = [], [], []
    for i in range(NUM_PARTS):
        w1_l.append(std1 * jax.random.normal(keys[3 * i], (input_dim, linear_num),
                                             dtype=jnp.float32))
        g_l.append(1.0 + 0.02 * jax.random.normal(keys[3 * i + 1], (linear_num,),
                                                  dtype=jnp.float32))
        w2_l.append(0.001 * jax.random.normal(keys[3 * i + 2], (linear_num, class_num),
                                              dtype=jnp.float32))
    w1 = jnp.stack(w1_l)                                        # (4, C, L)
    b1 = jnp.zeros((NUM_PARTS, linear_num), jnp.float32)
    gamma = jnp.stack(g_l)                                      # (4, L)
    beta = jnp.zeros((NUM_PARTS, linear_num), jnp.float32)
    running_mean = jnp.zeros((NUM_PARTS, linear_num), jnp.float32)
    running_var = jnp.ones((NUM_PARTS, linear_num), jnp.float32)
    w2 = jnp.stack(w2_l)                                        # (4, L, NC)
    b2 = jnp.zeros((NUM_PARTS, class_num), jnp.float32)
    return (w1, b1, gamma, beta, running_mean, running_var, w2, b2)


def prepare_params(raw, class_num, weight_dtype=jnp.bfloat16, eps=1e-5):
    """Fold eval-mode BN into Linear1, pad class dim to a lane multiple, cast weights."""
    w1, b1, gamma, beta, mean, var, w2, b2 = raw
    scale = gamma / jnp.sqrt(var + eps)                         # (4, L)
    shift = beta - mean * scale
    w1f = w1 * scale[:, None, :]                                # (4, C, L)
    b1f = b1 * scale + shift                                    # (4, L)
    ncp = _round_up(class_num, _LANE)
    pad = ncp - class_num
    w2p = jnp.pad(w2, ((0, 0), (0, 0), (0, pad)))               # (4, L, NCp)
    b2p = jnp.pad(b2, ((0, 0), (0, pad)))                       # (4, NCp)
    return (w1f.astype(weight_dtype),
            b1f[:, None, :].astype(jnp.float32),
            w2p.astype(weight_dtype),
            b2p[:, None, :].astype(jnp.float32))


def caswin_head_ref(x, raw, eps=1e-5):
    """Pure-JAX full-precision reference of the PyTorch module forward (eval mode)."""
    w1, b1, gamma, beta, mean, var, w2, b2 = raw
    parts = _pool_parts(x)
    hi = jax.lax.Precision.HIGHEST
    outs = []
    for i in range(NUM_PARTS):
        h = jnp.dot(parts[i], w1[i], precision=hi) + b1[i]
        h = (h - mean[i]) / jnp.sqrt(var[i] + eps) * gamma[i] + beta[i]
        outs.append(jnp.dot(h, w2[i], precision=hi) + b2[i])
    return outs


def caswin_head_ref_prepared(x, prepared, class_num):
    """Same math as the kernel (folded BN, bf16 operands) for a tight check."""
    w1, b1, w2, b2 = prepared
    parts = _pool_parts(x).astype(jnp.bfloat16)
    hi = jax.lax.Precision.HIGHEST
    outs = []
    for i in range(NUM_PARTS):
        h = jnp.dot(parts[i].astype(jnp.float32), w1[i].astype(jnp.float32),
                    precision=hi) + b1[i]
        hb = h.astype(jnp.bfloat16).astype(jnp.float32)
        y = jnp.dot(hb, w2[i].astype(jnp.float32), precision=hi) + b2[i]
        outs.append(y[:, :class_num])
    return outs


if __name__ == "__main__":
    # Small shapes consistent with the forward: swin_base feature map is
    # (B, 7, 7, 1024); here C is shrunk to 128, linear_num 512 -> 128,
    # class_num -> 16 (padded to 128 inside the wrapper).
    B, H, W, C = 2, 7, 7, 128
    LINEAR = 128
    CLASS_NUM = 16

    key = jax.random.PRNGKey(0)
    kx, kp = jax.random.split(key)
    x = jax.random.normal(kx, (B, H, W, C), dtype=jnp.float32)

    raw = init_raw_params(kp, C, LINEAR, CLASS_NUM)
    prepared = prepare_params(raw, CLASS_NUM)

    y_local = caswin_head_pallas(x, prepared, CLASS_NUM)
    y_local = [jax.block_until_ready(y) for y in y_local]

    # Tight check: kernel vs same-precision (BN-folded, bf16-operand) reference.
    y_tight = caswin_head_ref_prepared(x, prepared, CLASS_NUM)
    for yp, yr in zip(y_local, y_tight):
        assert yp.shape == (B, CLASS_NUM)
        assert jnp.allclose(yp, yr, atol=2e-4, rtol=1e-2), "mismatch vs folded ref"

    # Semantic check: kernel vs full-precision un-folded module reference
    # (difference comes only from bf16 rounding / fold order).
    y_ref = caswin_head_ref(x, raw)
    for yp, yr in zip(y_local, y_ref):
        assert jnp.allclose(yp, yr, atol=5e-3, rtol=5e-2), "mismatch vs module ref"

    print("KERNEL_OK")
</pallas_src>

<mosaic_0001>
module attributes {stable_mosaic.version = 11 : i64} {
  func.func @caswin_head_kernel(%arg0: i32, %arg1: memref<1x8x128xbf16, #tpu.memory_space<vmem>>, %arg2: memref<1x128x128xbf16, #tpu.memory_space<vmem>>, %arg3: memref<1x1x128xf32, #tpu.memory_space<vmem>>, %arg4: memref<1x128x128xbf16, #tpu.memory_space<vmem>>, %arg5: memref<1x1x128xf32, #tpu.memory_space<vmem>>, %arg6: memref<1x8x128xf32, #tpu.memory_space<vmem>>) attributes {dimension_semantics = [#tpu.dimension_semantics<parallel>], iteration_bounds = array<i64: 4>, scalar_prefetch = 0 : i64, scratch_operands = 0 : i64, tpu.core_type = #tpu.core_type<tc>, window_params = [{transform_indices = @transform_0, window_bounds = array<i64: 1, 8, 128>}, {transform_indices = @transform_1, window_bounds = array<i64: 1, 128, 128>}, {transform_indices = @transform_2, window_bounds = array<i64: 1, 1, 128>}, {transform_indices = @transform_3, window_bounds = array<i64: 1, 128, 128>}, {transform_indices = @transform_4, window_bounds = array<i64: 1, 1, 128>}, {transform_indices = @transform_5, window_bounds = array<i64: 1, 8, 128>}]} {
    %c0 = arith.constant 0 : index
    %c0_0 = arith.constant 0 : index
    %c0_1 = arith.constant 0 : index
    %0 = vector.load %arg1[%c0, %c0_0, %c0_1] : memref<1x8x128xbf16, #tpu.memory_space<vmem>>, vector<1x8x128xbf16>
    %1 = vector.shape_cast %0 : vector<1x8x128xbf16> to vector<8x128xbf16>
    %c0_2 = arith.constant 0 : index
    %c0_3 = arith.constant 0 : index
    %c0_4 = arith.constant 0 : index
    %2 = vector.load %arg2[%c0_2, %c0_3, %c0_4] : memref<1x128x128xbf16, #tpu.memory_space<vmem>>, vector<1x128x128xbf16>
    %3 = vector.shape_cast %2 : vector<1x128x128xbf16> to vector<128x128xbf16>
    %cst = arith.constant dense<0.000000e+00> : vector<8x128xf32>
    %4 = tpu.matmul %1, %3, %cst {dimension_numbers = #tpu.dot_dimension_numbers<[1], [0], [0], [1], [0, 0, 1, 1], [], []>} : vector<8x128xbf16>, vector<128x128xbf16>, vector<8x128xf32> -> vector<8x128xf32>
    %c0_5 = arith.constant 0 : index
    %c0_6 = arith.constant 0 : index
    %c0_7 = arith.constant 0 : index
    %5 = vector.load %arg3[%c0_5, %c0_6, %c0_7] : memref<1x1x128xf32, #tpu.memory_space<vmem>>, vector<1x1x128xf32>
    %6 = vector.shape_cast %5 : vector<1x1x128xf32> to vector<1x128xf32>
    %7 = vector.broadcast %6 : vector<1x128xf32> to vector<8x128xf32>
    %8 = arith.addf %4, %7 : vector<8x128xf32>
    %9 = arith.truncf %8 : vector<8x128xf32> to vector<8x128xbf16>
    %c0_8 = arith.constant 0 : index
    %c0_9 = arith.constant 0 : index
    %c0_10 = arith.constant 0 : index
    %10 = vector.load %arg4[%c0_8, %c0_9, %c0_10] : memref<1x128x128xbf16, #tpu.memory_space<vmem>>, vector<1x128x128xbf16>
    %11 = vector.shape_cast %10 : vector<1x128x128xbf16> to vector<128x128xbf16>
    %cst_11 = arith.constant dense<0.000000e+00> : vector<8x128xf32>
    %12 = tpu.matmul %9, %11, %cst_11 {dimension_numbers = #tpu.dot_dimension_numbers<[1], [0], [0], [1], [0, 0, 1, 1], [], []>} : vector<8x128xbf16>, vector<128x128xbf16>, vector<8x128xf32> -> vector<8x128xf32>
    %c0_12 = arith.constant 0 : index
    %c0_13 = arith.constant 0 : index
    %c0_14 = arith.constant 0 : index
    %13 = vector.load %arg5[%c0_12, %c0_13, %c0_14] : memref<1x1x128xf32, #tpu.memory_space<vmem>>, vector<1x1x128xf32>
    %14 = vector.shape_cast %13 : vector<1x1x128xf32> to vector<1x128xf32>
    %15 = vector.broadcast %14 : vector<1x128xf32> to vector<8x128xf32>
    %16 = arith.addf %12, %15 : vector<8x128xf32>
    %c0_15 = arith.constant 0 : index
    %c0_16 = arith.constant 0 : index
    %c0_17 = arith.constant 0 : index
    %17 = vector.load %arg6[%c0_15, %c0_16, %c0_17] : memref<1x8x128xf32, #tpu.memory_space<vmem>>, vector<1x8x128xf32>
    %18 = vector.shape_cast %17 : vector<1x8x128xf32> to vector<8x128xf32>
    %19 = vector.shape_cast %16 : vector<8x128xf32> to vector<1x8x128xf32>
    tpu.vector_store %arg6[%c0_15, %c0_16, %c0_17], %19 {strides = array<i32>} : memref<1x8x128xf32, #tpu.memory_space<vmem>>, vector<1x8x128xf32>,
    return
  }
  func.func @transform_0(%arg0: i32) -> (i32, i32, i32) {
    %c0_i32 = arith.constant 0 : i32
    %c0_i32_0 = arith.constant 0 : i32
    %c0_i32_1 = arith.constant 0 : i32
    return %arg0, %c0_i32, %c0_i32_0 : i32, i32, i32
  }
  func.func @transform_1(%arg0: i32) -> (i32, i32, i32) {
    %c0_i32 = arith.constant 0 : i32
    %c0_i32_0 = arith.constant 0 : i32
    %c0_i32_1 = arith.constant 0 : i32
    return %arg0, %c0_i32, %c0_i32_0 : i32, i32, i32
  }
  func.func @transform_2(%arg0: i32) -> (i32, i32, i32) {
    %c0_i32 = arith.constant 0 : i32
    %c0_i32_0 = arith.constant 0 : i32
    %c0_i32_1 = arith.constant 0 : i32
    return %arg0, %c0_i32, %c0_i32_0 : i32, i32, i32
  }
  func.func @transform_3(%arg0: i32) -> (i32, i32, i32) {
    %c0_i32 = arith.constant 0 : i32
    %c0_i32_0 = arith.constant 0 : i32
    %c0_i32_1 = arith.constant 0 : i32
    return %arg0, %c0_i32, %c0_i32_0 : i32, i32, i32
  }
  func.func @transform_4(%arg0: i32) -> (i32, i32, i32) {
    %c0_i32 = arith.constant 0 : i32
    %c0_i32_0 = arith.constant 0 : i32
    %c0_i32_1 = arith.constant 0 : i32
    return %arg0, %c0_i32, %c0_i32_0 : i32, i32, i32
  }
  func.func @transform_5(%arg0: i32) -> (i32, i32, i32) {
    %c0_i32 = arith.constant 0 : i32
    %c0_i32_0 = arith.constant 0 : i32
    %c0_i32_1 = arith.constant 0 : i32
    return %arg0, %c0_i32, %c0_i32_0 : i32, i32, i32
  }
}

</mosaic_0001>

<llo_original>
// kernel: tpu_custom_call.1
$region0: #{tpu_custom_call.1}
  #allocation0 [shape = 'u32[]', space=smem, size = 0x4, offset = 0x4, fixed_abs, tag = 'smem constant byte address 0x4 - core index']
  #allocation1 [shape = 'u32[144,128]{1,0:T(1,128)}', space=vmem, size = 0x12000, scoped, tag = 'internal scratch']
  %s0 = inlined_call_operand.hbm [shape: bf16[4,8,128], index: 0, kind: input, shape index: {}]
  %s1 = inlined_call_operand.hbm [shape: bf16[4,128,128], index: 1, kind: input, shape index: {}]
  %s2 = inlined_call_operand.vmem [shape: f32[4,1,128], index: 2, kind: input, shape index: {}]
  %s3 = inlined_call_operand.hbm [shape: bf16[4,128,128], index: 3, kind: input, shape index: {}]
  %s4 = inlined_call_operand.vmem [shape: f32[4,1,128], index: 4, kind: input, shape index: {}]
  %s5 = inlined_call_operand.hbm [shape: f32[4,8,128], index: 5, kind: output, shape index: {}]
  %s6 = sld [smem:[#allocation0]]
  $region65: #{tpu_custom_call.1} parent=0
    _
  %s8 = ssub.s32 1, %s6
  %s9 = scalar_select 0, %s8, %s6
  $region1: #{tpu_custom_call.1} parent=0
    #allocation2 [shape = 'u8[4096]{0}', space=vmem, size = 0x1000, scoped, tag = 'input window, operand 0']
    #allocation3 [shape = 's32[2]{0}', space=sflag, size = 0x8, scoped, tag = 'scoped memory for tpu_custom_call.1']
    #allocation4 [shape = 's32[2]{0}', space=sflag, size = 0x8, scoped, tag = 'scoped memory for tpu_custom_call.1']
    #allocation5 [shape = 'u8[65536]{0}', space=vmem, size = 0x10000, scoped, tag = 'input window, operand 1']
    #allocation6 [shape = 's32[2]{0}', space=sflag, size = 0x8, scoped, tag = 'scoped memory for tpu_custom_call.1']
    #allocation7 [shape = 'u8[65536]{0}', space=vmem, size = 0x10000, scoped, tag = 'input window, operand 3']
    #allocation8 [shape = 'u8[8192]{0}', space=vmem, size = 0x2000, scoped, tag = 'output window, operand 0']
    %10 = vsyncpa [#allocation3], 0
    %s11 = scalar_lea.sflag [#allocation3], 1
    %12 = vsyncpa %s11, 0
    %13 = vsyncpa [#allocation6], 0
    %s14 = scalar_lea.sflag [#allocation6], 1
    %15 = vsyncpa %s14, 0
    %16 = vsyncpa [#allocation4], 0
    %s17 = scalar_lea.sflag [#allocation4], 1
    %18 = vsyncpa %s17, 0
    loop: start=0, step=1, limit=6
    $region2: #{tpu_custom_call.1} parent=1 // loop_pre_header
      _
    $region3: #{tpu_custom_call.1} parent=1 // loop_header
      %s20 = sphi 0, %s24
      %p21 = scmp.ge.s32.totalorder %s20, 6
      %s30 = sphi 0, %s32
      %s33 = sphi 0, %s30
      %s34 = sphi 0, %s33
      %s50 = sphi 0, %s34
      %s56 = sphi 0, %s58
      %s59 = sphi 0, %s56
      %s60 = sphi 0, %s59
      %s76 = sphi 0, %s60
      %s82 = sphi 0, %s84
      %s85 = sphi 0, %s82
      %s86 = sphi 0, %s85
      %s102 = sphi 0, %s86
      %s108 = sphi 0, %s110
      %s111 = sphi 0, %s108
      %s112 = sphi 0, %s111
      %s128 = sphi 0, %s112
      %s134 = sphi 0, %s136
      %s137 = sphi 0, %s134
      %s138 = sphi 0, %s137
      %s154 = sphi 0, %s138
      %s160 = sphi 0, %s162
      %s163 = sphi 0, %s160
      %s164 = sphi 0, %s163
      %s180 = sphi 0, %s164
    $region4: #{tpu_custom_call.1} parent=1 // loop_header_branch
      %23 = sbr.rel (%p21) target = $region8
    $region5: #{tpu_custom_call.1} parent=1 // loop_body
      %s25 = ssub.s32 %s20, 1
      %s26 = ssub.s32 %s20, 2
      %s27 = sadd.s32 %s20, 1
      %s28 = ssub.s32 %s20, %s27
      %p29 = scmp.eq.s32.totalorder %s28, 0
      %s31 = sadd.s32 %s30, 1
      %s32 = scalar_select %p29, %s30, %s31
      %p35 = pneg %p29
      %p36 = scmp.eq.s32.totalorder %s20, 3
      %p37 = por %p35, %p36
      %p38 = scmp.ne.s32.totalorder %s30, %s33
      %p39 = scmp.eq.s32.totalorder %s20, 0
      %p40 = por %p38, %p39
      %p41 = scmp.ne.s32.totalorder %s30, %s33
      %p42 = scmp.eq.s32.totalorder %s25, 3
      %p43 = por %p41, %p42
      %p44 = scmp.ne.s32.totalorder %s33, %s34
      %p45 = scmp.eq.s32.totalorder %s25, 0
      %p46 = por %p44, %p45
      %p47 = scmp.ne.s32.totalorder %s33, %s34
      %p48 = scmp.eq.s32.totalorder %s26, 3
      %p49 = por %p47, %p48
      %p51 = scmp.ne.s32.totalorder %s34, %s50
      %p52 = scmp.eq.s32.totalorder %s26, 0
      %p53 = por %p51, %p52
      %s54 = ssub.s32 %s20, %s27
      %p55 = scmp.eq.s32.totalorder %s54, 0
      %s57 = sadd.s32 %s56, 1
      %s58 = scalar_select %p55, %s56, %s57
      %p61 = pneg %p55
      %p62 = scmp.eq.s32.totalorder %s20, 3
      %p63 = por %p61, %p62
      %p64 = scmp.ne.s32.totalorder %s56, %s59
      %p65 = scmp.eq.s32.totalorder %s20, 0
      %p66 = por %p64, %p65
      %p67 = scmp.ne.s32.totalorder %s56, %s59
      %p68 = scmp.eq.s32.totalorder %s25, 3
      %p69 = por %p67, %p68
      %p70 = scmp.ne.s32.totalorder %s59, %s60
      %p71 = scmp.eq.s32.totalorder %s25, 0
      %p72 = por %p70, %p71
      %p73 = scmp.ne.s32.totalorder %s59, %s60
      %p74 = scmp.eq.s32.totalorder %s26, 3
      %p75 = por %p73, %p74
      %p77 = scmp.ne.s32.totalorder %s60, %s76
      %p78 = scmp.eq.s32.totalorder %s26, 0
      %p79 = por %p77, %p78
      %s80 = ssub.s32 %s20, %s27
      %p81 = scmp.eq.s32.totalorder %s80, 0
      %s83 = sadd.s32 %s82, 1
      %s84 = scalar_select %p81, %s82, %s83
      %p87 = pneg %p81
      %p88 = scmp.eq.s32.totalorder %s20, 3
      %p89 = por %p87, %p88
      %p90 = scmp.ne.s32.totalorder %s82, %s85
      %p91 = scmp.eq.s32.totalorder %s20, 0
      %p92 = por %p90, %p91
      %p93 = scmp.ne.s32.totalorder %s82, %s85
      %p94 = scmp.eq.s32.totalorder %s25, 3
      %p95 = por %p93, %p94
      %p96 = scmp.ne.s32.totalorder %s85, %s86
      %p97 = scmp.eq.s32.totalorder %s25, 0
      %p98 = por %p96, %p97
      %p99 = scmp.ne.s32.totalorder %s85, %s86
      %p100 = scmp.eq.s32.totalorder %s26, 3
      %p101 = por %p99, %p100
      %p103 = scmp.ne.s32.totalorder %s86, %s102
      %p104 = scmp.eq.s32.totalorder %s26, 0
      %p105 = por %p103, %p104
      %s106 = ssub.s32 %s20, %s27
      %p107 = scmp.eq.s32.totalorder %s106, 0
      %s109 = sadd.s32 %s108, 1
      %s110 = scalar_select %p107, %s108, %s109
      %p113 = pneg %p107
      %p114 = scmp.eq.s32.totalorder %s20, 3
      %p115 = por %p113, %p114
      %p116 = scmp.ne.s32.totalorder %s108, %s111
      %p117 = scmp.eq.s32.totalorder %s20, 0
      %p118 = por %p116, %p117
      %p119 = scmp.ne.s32.totalorder %s108, %s111
      %p120 = scmp.eq.s32.totalorder %s25, 3
      %p121 = por %p119, %p120
      %p122 = scmp.ne.s32.totalorder %s111, %s112
      %p123 = scmp.eq.s32.totalorder %s25, 0
      %p124 = por %p122, %p123
      %p125 = scmp.ne.s32.totalorder %s111, %s112
      %p126 = scmp.eq.s32.totalorder %s26, 3
      %p127 = por %p125, %p126
      %p129 = scmp.ne.s32.totalorder %s112, %s128
      %p130 = scmp.eq.s32.totalorder %s26, 0
      %p131 = por %p129, %p130
      %s132 = ssub.s32 %s20, %s27
      %p133 = scmp.eq.s32.totalorder %s132, 0
      %s135 = sadd.s32 %s134, 1
      %s136 = scalar_select %p133, %s134, %s135
      %p139 = pneg %p133
      %p140 = scmp.eq.s32.totalorder %s20, 3
      %p141 = por %p139, %p140
      %p142 = scmp.ne.s32.totalorder %s134, %s137
      %p143 = scmp.eq.s32.totalorder %s20, 0
      %p144 = por %p142, %p143
      %p145 = scmp.ne.s32.totalorder %s134, %s137
      %p146 = scmp.eq.s32.totalorder %s25, 3
      %p147 = por %p145, %p146
      %p148 = scmp.ne.s32.totalorder %s137, %s138
      %p149 = scmp.eq.s32.totalorder %s25, 0
      %p150 = por %p148, %p149
      %p151 = scmp.ne.s32.totalorder %s137, %s138
      %p152 = scmp.eq.s32.totalorder %s26, 3
      %p153 = por %p151, %p152
      %p155 = scmp.ne.s32.totalorder %s138, %s154
      %p156 = scmp.eq.s32.totalorder %s26, 0
      %p157 = por %p155, %p156
      %s158 = ssub.s32 %s20, %s27
      %p159 = scmp.eq.s32.totalorder %s158, 0
      %s161 = sadd.s32 %s160, 1
      %s162 = scalar_select %p159, %s160, %s161
      %p165 = pneg %p159
      %p166 = scmp.eq.s32.totalorder %s20, 3
      %p167 = por %p165, %p166
      %p168 = scmp.ne.s32.totalorder %s160, %s163
      %p169 = scmp.eq.s32.totalorder %s20, 0
      %p170 = por %p168, %p169
      %p171 = scmp.ne.s32.totalorder %s160, %s163
      %p172 = scmp.eq.s32.totalorder %s25, 3
      %p173 = por %p171, %p172
      %p174 = scmp.ne.s32.totalorder %s163, %s164
      %p175 = scmp.eq.s32.totalorder %s25, 0
      %p176 = por %p174, %p175
      %p177 = scmp.ne.s32.totalorder %s163, %s164
      %p178 = scmp.eq.s32.totalorder %s26, 3
      %p179 = por %p177, %p178
      %p181 = scmp.ne.s32.totalorder %s164, %s180
      %p182 = scmp.eq.s32.totalorder %s26, 0
      %p183 = por %p181, %p182
      %p184 = scmp.le.s32.totalorder 1, %s20
      %p185 = scmp.lt.s32.totalorder %s20, 5
      %p186 = pnand %p184, %p185
      %p187 = pneg %p186
      // Predicated region
      $region9: #{tpu_custom_call.1} parent=5 // pred_check
        _
      $region10: #{tpu_custom_call.1} parent=5 // pred_check_branch
        %189 = sbr.rel (%p186) target = $region12
      $region11: #{tpu_custom_call.1} parent=5 // pred_region
        %s190 = ssub.s32 %s20, 1
      $region12: #{tpu_custom_call.1} parent=5 // pred_fallthru
        _
      %p191 = scmp.lt.s32.totalorder %s20, 4
      // Predicated region
      $region13: #{tpu_custom_call.1} parent=5 // pred_check
        %p192 = pneg %p191
      $region14: #{tpu_custom_call.1} parent=5 // pred_check_branch
        %194 = sbr.rel (%p192) target = $region16
      $region15: #{tpu_custom_call.1} parent=5 // pred_region
        // Predicated region
        $region17: #{tpu_custom_call.1} parent=15 // pred_check
          %p195 = pneg %p40
        $region18: #{tpu_custom_call.1} parent=15 // pred_check_branch
          %197 = sbr.rel (%p195) target = $region20
        $region19: #{tpu_custom_call.1} parent=15 // pred_region
          %s198 = sand.u32 %s30, 1
          %s199 = scalar_lea.sflag [#allocation3], %s198
          %s200 = sand.u32 %s30, 1
          %s201 = smul.addr %s200, 4
          %s202 = scalar_lea.vmem [#allocation2], %s201
          %s204 = ssub.s32 64, 64
          %205 = vsyncadd %s199, %s204
          %s206 = smul.addr %s20, 64
          %s207 = scalar_lea.hbm %s0, %s206
          %s209 = sshll.u32 %s202, 4
          %s210 = int_to_ptr.vmem [resolvable:$true] %s209
          %212 = dma.hbm_to_vmem [thread:$0]  %s207, 64, %s210, %s199
        $region20: #{tpu_custom_call.1} parent=15 // pred_fallthru
          _
        // Predicated region
        $region21: #{tpu_custom_call.1} parent=15 // pred_check
          %p213 = pneg %p66
        $region22: #{tpu_custom_call.1} parent=15 // pred_check_branch
          %215 = sbr.rel (%p213) target = $region24
        $region23: #{tpu_custom_call.1} parent=15 // pred_region
          %s216 = sand.u32 %s20, 1
          %s217 = scalar_lea.sflag [#allocation6], %s216
          %s218 = sand.u32 %s56, 1
          %s219 = smul.addr %s218, 64
          %s220 = scalar_lea.vmem [#allocation5], %s219
          %s222 = ssub.s32 1024, 1024
          %223 = vsyncadd %s217, %s222
          %s224 = smul.addr %s20, 16
          %s225 = smul.addr %s224, 64
          %s226 = scalar_lea.hbm %s1, %s225
          %s227 = sshll.u32 %s220, 4
          %s228 = int_to_ptr.vmem [resolvable:$true] %s227
          %233 = dma.hbm_to_vmem [thread:$0]  %s226, 1024, %s228, %s217, 64, 64, 4
        $region24: #{tpu_custom_call.1} parent=15 // pred_fallthru
          _
        // Predicated region
        $region25: #{tpu_custom_call.1} parent=15 // pred_check
          %p234 = pneg %p92
        $region26: #{tpu_custom_call.1} parent=15 // pred_check_branch
          %236 = sbr.rel (%p234) target = $region28
        $region27: #{tpu_custom_call.1} parent=15 // pred_region
          %p237 = scmp.lt.s32.totalorder %s20, 3
          %s238 = scalar_select %p237, %s20, 3
          %s239 = scalar_lea.vmem %s2, %s238
        $region28: #{tpu_custom_call.1} parent=15 // pred_fallthru
          _
        // Predicated region
        $region29: #{tpu_custom_call.1} parent=15 // pred_check
          %p240 = pneg %p118
        $region30: #{tpu_custom_call.1} parent=15 // pred_check_branch
          %242 = sbr.rel (%p240) target = $region32
        $region31: #{tpu_custom_call.1} parent=15 // pred_region
          %s243 = sand.u32 %s20, 1
          %s244 = scalar_lea.sflag [#allocation6], %s243
          %s245 = sand.u32 %s108, 1
          %s246 = smul.addr %s245, 64
          %s247 = scalar_lea.vmem [#allocation7], %s246
          %s249 = ssub.s32 1024, 1024
          %250 = vsyncadd %s244, %s249
          %s251 = smul.addr %s20, 16
          %s252 = smul.addr %s251, 64
          %s253 = scalar_lea.hbm %s3, %s252
          %s254 = sshll.u32 %s247, 4
          %s255 = int_to_ptr.vmem [resolvable:$true] %s254
          %260 = dma.hbm_to_vmem [thread:$0]  %s253, 1024, %s255, %s244, 64, 64, 4
        $region32: #{tpu_custom_call.1} parent=15 // pred_fallthru
          _
        // Predicated region
        $region33: #{tpu_custom_call.1} parent=15 // pred_check
          %p261 = pneg %p144
        $region34: #{tpu_custom_call.1} parent=15 // pred_check_branch
          %263 = sbr.rel (%p261) target = $region36
        $region35: #{tpu_custom_call.1} parent=15 // pred_region
          %p264 = scmp.lt.s32.totalorder %s20, 3
          %s265 = scalar_select %p264, %s20, 3
          %s266 = scalar_lea.vmem %s4, %s265
        $region36: #{tpu_custom_call.1} parent=15 // pred_fallthru
          _
      $region16: #{tpu_custom_call.1} parent=5 // pred_fallthru
        _
      %p267 = scmp.le.s32.totalorder 1, %s20
      %p268 = scmp.lt.s32.totalorder %s20, 5
      %p269 = pnand %p267, %p268
      %p270 = pneg %p269
      // Predicated region
      $region37: #{tpu_custom_call.1} parent=5 // pred_check
        _
      $region38: #{tpu_custom_call.1} parent=5 // pred_check_branch
        %272 = sbr.rel (%p269) target = $region40
      $region39: #{tpu_custom_call.1} parent=5 // pred_region
        %s273 = ssub.s32 %s20, 1
        %s274 = sand.u32 %s33, 1
        %s275 = scalar_lea.sflag [#allocation3], %s274
        %s276 = sand.u32 %s33, 1
        %s277 = smul.addr %s276, 4
        %s278 = scalar_lea.vmem [#allocation2], %s277
        // Predicated region
        $region41: #{tpu_custom_call.1} parent=39 // pred_check
          %p279 = pneg %p46
        $region42: #{tpu_custom_call.1} parent=39 // pred_check_branch
          %281 = sbr.rel (%p279) target = $region44
        $region43: #{tpu_custom_call.1} parent=39 // pred_region
          %282 = dma.done %s275, 64
        $region44: #{tpu_custom_call.1} parent=39 // pred_fallthru
          _
        %s283 = sand.u32 %s25, 1
        %s284 = scalar_lea.sflag [#allocation6], %s283
        %s285 = sand.u32 %s59, 1
        %s286 = smul.addr %s285, 64
        %s287 = scalar_lea.vmem [#allocation5], %s286
        // Predicated region
        $region45: #{tpu_custom_call.1} parent=39 // pred_check
          %p288 = pneg %p72
        $region46: #{tpu_custom_call.1} parent=39 // pred_check_branch
          %290 = sbr.rel (%p288) target = $region48
        $region47: #{tpu_custom_call.1} parent=39 // pred_region
          %291 = dma.done %s284, 1024
        $region48: #{tpu_custom_call.1} parent=39 // pred_fallthru
          _
        %s292 = sand.u32 %s25, 1
        %s293 = scalar_lea.sflag [#allocation6], %s292
        %s294 = sand.u32 %s111, 1
        %s295 = smul.addr %s294, 64
        %s296 = scalar_lea.vmem [#allocation7], %s295
        // Predicated region
        $region49: #{tpu_custom_call.1} parent=39 // pred_check
          %p297 = pneg %p124
        $region50: #{tpu_custom_call.1} parent=39 // pred_check_branch
          %299 = sbr.rel (%p297) target = $region52
        $region51: #{tpu_custom_call.1} parent=39 // pred_region
          %300 = dma.done %s293, 1024
        $region52: #{tpu_custom_call.1} parent=39 // pred_fallthru
          _
        %s301 = sand.u32 %s33, 1
        %s302 = scalar_lea.sflag [#allocation3], %s301
        %s303 = sand.u32 %s33, 1
        %s304 = smul.addr %s303, 4
        %s305 = scalar_lea.vmem [#allocation2], %s304
        %p306 = pneg %p46
        %p307 = pneg %p43
        %s308 = sand.u32 %s25, 1
        %s309 = scalar_lea.sflag [#allocation6], %s308
        %s310 = sand.u32 %s59, 1
        %s311 = smul.addr %s310, 64
        %s312 = scalar_lea.vmem [#allocation5], %s311
        %p313 = pneg %p72
        %p314 = pneg %p69
        %p315 = scmp.lt.s32.totalorder %s25, 3
        %s316 = scalar_select %p315, %s25, 3
        %s317 = scalar_lea.vmem %s2, %s316
        %p318 = pneg %p98
        %p319 = pneg %p95
        %s320 = sand.u32 %s25, 1
        %s321 = scalar_lea.sflag [#allocation6], %s320
        %s322 = sand.u32 %s111, 1
        %s323 = smul.addr %s322, 64
        %s324 = scalar_lea.vmem [#allocation7], %s323
        %p325 = pneg %p124
        %p326 = pneg %p121
        %p327 = scmp.lt.s32.totalorder %s25, 3
        %s328 = scalar_select %p327, %s25, 3
        %s329 = scalar_lea.vmem %s4, %s328
        %p330 = pneg %p150
        %p331 = pneg %p147
        %p332 = pneg %p176
        %p333 = pneg %p173
        %s334 = sand.u32 %s163, 1
        %s335 = scalar_lea.sflag [#allocation4], %s334
        %s336 = sand.u32 %s163, 1
        %s337 = smul.addr %s336, 8
        %s338 = scalar_lea.vmem [#allocation8], %s337
        %p339 = scmp.lt.s32.totalorder %s25, 3
        %s340 = scalar_select %p339, %s25, 3
        %s341 = scalar_lea.vmem %s2, %s340
        %p342 = scmp.lt.s32.totalorder %s25, 3
        %s343 = scalar_select %p342, %s25, 3
        %s344 = scalar_lea.vmem %s4, %s343
        %v346 = vld [vmem:[%s278] sm:$0xf]
        %v347 = vld [vmem:[%s287] sm:$0xf]
        %v348 = vld [vmem:[%s287 + $0x4] sm:$0xf]
        %v349 = vld [vmem:[%s287 + $0x8] sm:$0xf]
        %v350 = vld [vmem:[%s287 + $0xc] sm:$0xf]
        %v351 = vld [vmem:[%s287 + $0x10] sm:$0xf]
        %v352 = vld [vmem:[%s287 + $0x14] sm:$0xf]
        %v353 = vld [vmem:[%s287 + $0x18] sm:$0xf]
        %v354 = vld [vmem:[%s287 + $0x1c] sm:$0xf]
        %v355 = vld [vmem:[%s287 + $0x20] sm:$0xf]
        %v356 = vld [vmem:[%s287 + $0x24] sm:$0xf]
        %v357 = vld [vmem:[%s287 + $0x28] sm:$0xf]
        %v358 = vld [vmem:[%s287 + $0x2c] sm:$0xf]
        %v359 = vld [vmem:[%s287 + $0x30] sm:$0xf]
        %v360 = vld [vmem:[%s287 + $0x34] sm:$0xf]
        %v361 = vld [vmem:[%s287 + $0x38] sm:$0xf]
        %v362 = vld [vmem:[%s287 + $0x3c] sm:$0xf]
        %v363 = vld [vmem:[%s341] sm:$0x1]
        %v365 = vlaneseq
        %v366 = vshrl.u32 %v365, 7
        %v367 = vsub.s32 0, %v366
        %v368 = vrot.slane %v363, %v367
        %v386 = vunpack.c.l.b16 %v347
        %v387 = vunpack.c.l.b16 %v348
        %v388 = vunpack.c.l.b16 %v349
        %v389 = vunpack.c.l.b16 %v350
        %v390 = vunpack.c.l.b16 %v351
        %v391 = vunpack.c.l.b16 %v352
        %v392 = vunpack.c.l.b16 %v353
        %v393 = vunpack.c.l.b16 %v354
        %v394 = vunpack.c.l.b16 %v355
        %v395 = vunpack.c.l.b16 %v356
        %v396 = vunpack.c.l.b16 %v357
        %v397 = vunpack.c.l.b16 %v358
        %v398 = vunpack.c.l.b16 %v359
        %v399 = vunpack.c.l.b16 %v360
        %v400 = vunpack.c.l.b16 %v361
        %v401 = vunpack.c.l.b16 %v362
        %v402 = vpack.c.b16 %v387, %v386
        %v403 = vpack.c.b16 %v389, %v388
        %v404 = vpack.c.b16 %v391, %v390
        %v405 = vpack.c.b16 %v393, %v392
        %v406 = vpack.c.b16 %v395, %v394
        %v407 = vpack.c.b16 %v397, %v396
        %v408 = vpack.c.b16 %v399, %v398
        %v409 = vpack.c.b16 %v401, %v400
        %418 = vmatprep.subr.bf16.mxu0 0
        %419 = vmatpush1.bf16.msra.mxu0 %v402
        %420 = vmatprep.subr.bf16.mxu0 0
        %421 = vmatpush1.bf16.msra.mxu0 %v403
        %422 = vmatprep.subr.bf16.mxu0 0
        %423 = vmatpush1.bf16.msra.mxu0 %v404
        %424 = vmatprep.subr.bf16.mxu0 0
        %425 = vmatpush1.bf16.msra.mxu0 %v405
        %426 = vmatprep.subr.bf16.mxu0 0
        %427 = vmatpush1.bf16.msra.mxu0 %v406
        %428 = vmatprep.subr.bf16.mxu0 0
        %429 = vmatpush1.bf16.msra.mxu0 %v407
        %430 = vmatprep.subr.bf16.mxu0 0
        %431 = vmatpush1.bf16.msra.mxu0 %v408
        %432 = vmatprep.subr.bf16.mxu0 0
        %433 = vmatpush1.bf16.msra.mxu0 %v409
        %434 = vmatprep.subr.bf16.mxu0 0
        %435 = vmatpush1.bf16.msra.mxu0 0
        %436 = vmatprep.subr.bf16.mxu0 0
        %437 = vmatpush1.bf16.msra.mxu0 0
        %438 = vmatprep.subr.bf16.mxu0 0
        %439 = vmatpush1.bf16.msra.mxu0 0
        %440 = vmatprep.subr.bf16.mxu0 0
        %441 = vmatpush1.bf16.msra.mxu0 0
        %442 = vmatprep.subr.bf16.mxu0 0
        %443 = vmatpush1.bf16.msra.mxu0 0
        %444 = vmatprep.subr.bf16.mxu0 0
        %445 = vmatpush1.bf16.msra.mxu0 0
        %446 = vmatprep.subr.bf16.mxu0 0
        %447 = vmatpush1.bf16.msra.mxu0 0
        %448 = vmatprep.subr.bf16.mxu0 0
        %449 = vmatpush1.bf16.msra.mxu0 0
        %450 = vmatprep.mubr.bf16.mxu0 0
        %451 = vmatmul.mubr.bf16.gmra.mrb[0].mxu0 %v346
        %v452 = vpop.f32.mrb[0].mxu0
        %v453 = vadd.f32 %v368, %v452
        %v454 = vpop.f32.mrb[0].mxu0
        %v455 = vpop.f32.mrb[0].mxu0
        %v456 = vpop.f32.mrb[0].mxu0
        %457 = vdwg.mxu0
        %v458 = vpack.c.bf16 %v453, %v453
        %v459 = vld [vmem:[%s296] sm:$0xf]
        %v460 = vld [vmem:[%s296 + $0x4] sm:$0xf]
        %v461 = vld [vmem:[%s296 + $0x8] sm:$0xf]
        %v462 = vld [vmem:[%s296 + $0xc] sm:$0xf]
        %v463 = vld [vmem:[%s296 + $0x10] sm:$0xf]
        %v464 = vld [vmem:[%s296 + $0x14] sm:$0xf]
        %v465 = vld [vmem:[%s296 + $0x18] sm:$0xf]
        %v466 = vld [vmem:[%s296 + $0x1c] sm:$0xf]
        %v467 = vld [vmem:[%s296 + $0x20] sm:$0xf]
        %v468 = vld [vmem:[%s296 + $0x24] sm:$0xf]
        %v469 = vld [vmem:[%s296 + $0x28] sm:$0xf]
        %v470 = vld [vmem:[%s296 + $0x2c] sm:$0xf]
        %v471 = vld [vmem:[%s296 + $0x30] sm:$0xf]
        %v472 = vld [vmem:[%s296 + $0x34] sm:$0xf]
        %v473 = vld [vmem:[%s296 + $0x38] sm:$0xf]
        %v474 = vld [vmem:[%s296 + $0x3c] sm:$0xf]
        %v475 = vld [vmem:[%s344] sm:$0x1]
        %v477 = vlaneseq
        %v478 = vshrl.u32 %v477, 7
        %v479 = vsub.s32 0, %v478
        %v480 = vrot.slane %v475, %v479
        %v498 = vunpack.c.l.b16 %v459
        %v499 = vunpack.c.l.b16 %v460
        %v500 = vunpack.c.l.b16 %v461
        %v501 = vunpack.c.l.b16 %v462
        %v502 = vunpack.c.l.b16 %v463
        %v503 = vunpack.c.l.b16 %v464
        %v504 = vunpack.c.l.b16 %v465
        %v505 = vunpack.c.l.b16 %v466
        %v506 = vunpack.c.l.b16 %v467
        %v507 = vunpack.c.l.b16 %v468
        %v508 = vunpack.c.l.b16 %v469
        %v509 = vunpack.c.l.b16 %v470
        %v510 = vunpack.c.l.b16 %v471
        %v511 = vunpack.c.l.b16 %v472
        %v512 = vunpack.c.l.b16 %v473
        %v513 = vunpack.c.l.b16 %v474
        %v514 = vpack.c.b16 %v499, %v498
        %v515 = vpack.c.b16 %v501, %v500
        %v516 = vpack.c.b16 %v503, %v502
        %v517 = vpack.c.b16 %v505, %v504
        %v518 = vpack.c.b16 %v507, %v506
        %v519 = vpack.c.b16 %v509, %v508
        %v520 = vpack.c.b16 %v511, %v510
        %v521 = vpack.c.b16 %v513, %v512
        %530 = vmatprep.subr.bf16.mxu0 0
        %531 = vmatpush1.bf16.msra.mxu0 %v514
        %532 = vmatprep.subr.bf16.mxu0 0
        %533 = vmatpush1.bf16.msra.mxu0 %v515
        %534 = vmatprep.subr.bf16.mxu0 0
        %535 = vmatpush1.bf16.msra.mxu0 %v516
        %536 = vmatprep.subr.bf16.mxu0 0
        %537 = vmatpush1.bf16.msra.mxu0 %v517
        %538 = vmatprep.subr.bf16.mxu0 0
        %539 = vmatpush1.bf16.msra.mxu0 %v518
        %540 = vmatprep.subr.bf16.mxu0 0
        %541 = vmatpush1.bf16.msra.mxu0 %v519
        %542 = vmatprep.subr.bf16.mxu0 0
        %543 = vmatpush1.bf16.msra.mxu0 %v520
        %544 = vmatprep.subr.bf16.mxu0 0
        %545 = vmatpush1.bf16.msra.mxu0 %v521
        %546 = vmatprep.subr.bf16.mxu0 0
        %547 = vmatpush1.bf16.msra.mxu0 0
        %548 = vmatprep.subr.bf16.mxu0 0
        %549 = vmatpush1.bf16.msra.mxu0 0
        %550 = vmatprep.subr.bf16.mxu0 0
        %551 = vmatpush1.bf16.msra.mxu0 0
        %552 = vmatprep.subr.bf16.mxu0 0
        %553 = vmatpush1.bf16.msra.mxu0 0
        %554 = vmatprep.subr.bf16.mxu0 0
        %555 = vmatpush1.bf16.msra.mxu0 0
        %556 = vmatprep.subr.bf16.mxu0 0
        %557 = vmatpush1.bf16.msra.mxu0 0
        %558 = vmatprep.subr.bf16.mxu0 0
        %559 = vmatpush1.bf16.msra.mxu0 0
        %560 = vmatprep.subr.bf16.mxu0 0
        %561 = vmatpush1.bf16.msra.mxu0 0
        %562 = vmatprep.mubr.bf16.mxu0 0
        %563 = vmatmul.mubr.bf16.gmra.mrb[0].mxu0 %v458
        %v564 = vpop.f32.mrb[0].mxu0
        %v565 = vadd.f32 %v480, %v564
        %v566 = vpop.f32.mrb[0].mxu0
        %v567 = vpop.f32.mrb[0].mxu0
        %v568 = vpop.f32.mrb[0].mxu0
        %569 = vdwg.mxu0
        %570 = vst [vmem:[%s338] sm:$0xff] %v565
        %s571 = sand.u32 %s163, 1
        %s572 = scalar_lea.sflag [#allocation4], %s571
        %s573 = sand.u32 %s163, 1
        %s574 = smul.addr %s573, 8
        %s575 = scalar_lea.vmem [#allocation8], %s574
        // Predicated region
        $region53: #{tpu_custom_call.1} parent=39 // pred_check
          %p576 = pneg %p173
        $region54: #{tpu_custom_call.1} parent=39 // pred_check_branch
          %578 = sbr.rel (%p576) target = $region56
        $region55: #{tpu_custom_call.1} parent=39 // pred_region
          %s580 = ssub.s32 128, 128
          %581 = vsyncadd %s572, %s580
          %s582 = smul.addr %s25, 128
          %s583 = scalar_lea.hbm %s5, %s582
          %s585 = sshll.u32 %s575, 4
          %s586 = int_to_ptr.vmem [resolvable:$true] %s585
          %588 = dma.vmem_to_hbm [thread:$0]  %s586, 128, %s583, %s572
        $region56: #{tpu_custom_call.1} parent=39 // pred_fallthru
          _
      $region40: #{tpu_custom_call.1} parent=5 // pred_fallthru
        _
      %p589 = scmp.le.s32.totalorder 2, %s20
      // Predicated region
      $region57: #{tpu_custom_call.1} parent=5 // pred_check
        %p590 = pneg %p589
      $region58: #{tpu_custom_call.1} parent=5 // pred_check_branch
        %592 = sbr.rel (%p590) target = $region60
      $region59: #{tpu_custom_call.1} parent=5 // pred_region
        %s593 = ssub.s32 %s20, 2
        // Predicated region
        $region61: #{tpu_custom_call.1} parent=59 // pred_check
          %p594 = pneg %p179
        $region62: #{tpu_custom_call.1} parent=59 // pred_check_branch
          %596 = sbr.rel (%p594) target = $region64
        $region63: #{tpu_custom_call.1} parent=59 // pred_region
          %s597 = sand.u32 %s164, 1
          %s598 = scalar_lea.sflag [#allocation4], %s597
          %s599 = sand.u32 %s164, 1
          %s600 = smul.addr %s599, 8
          %s601 = scalar_lea.vmem [#allocation8], %s600
          %602 = dma.done %s598, 128
        $region64: #{tpu_custom_call.1} parent=59 // pred_fallthru
          _
      $region60: #{tpu_custom_call.1} parent=5 // pred_fallthru
        _
    $region6: #{tpu_custom_call.1} parent=1 // loop_footer
      %s24 = sadd.s32 1, %s20
    $region7: #{tpu_custom_call.1} parent=1 // loop_footer_branch
      %19 = sbr.rel target = $region3
    $region8: #{tpu_custom_call.1} parent=1 // loop_exit
      _
    %603 = vsyncpa [#allocation3], 1
    %s604 = scalar_lea.sflag [#allocation3], 1
    %605 = vsyncpa %s604, 1
    %606 = vsyncpa [#allocation6], 1
    %s607 = scalar_lea.sflag [#allocation6], 1
    %608 = vsyncpa %s607, 1
    %609 = vsyncpa [#allocation4], 1
    %s610 = scalar_lea.sflag [#allocation4], 1
    %611 = vsyncpa %s610, 1

</llo_original>
